<compile_context>
chip_gen: v6e
topology: v6e:2x2x1
jax: 0.10.0
libtpu: 0.0.40
codegen_flags: <defaults>
</compile_context>

<pallas_src>
import functools

import jax
import jax.numpy as jnp
from jax.experimental import pallas as pl
from jax.experimental.pallas import tpu as pltpu

LN_EPS = 1e-5  # PyTorch nn.LayerNorm default


def _round_up(x, m):
    return ((x + m - 1) // m) * m


def _cdiv(a, b):
    return (a + b - 1) // b


# ---------------------------------------------------------------------------
# Kernel
# ---------------------------------------------------------------------------
def classify_kernel(x_ref, gamma_ref, beta_ref, wt_ref, bias_ref, o_ref, *, inv_d):
    """Fused LayerNorm (f32 stats, single reduction pass) + Linear (MXU, f32 acc)."""
    x = x_ref[...].astype(jnp.float32)                 # (TB, Dp), zero-padded lanes
    s = jnp.sum(x, axis=-1, keepdims=True)             # padding contributes 0
    ss = jnp.sum(x * x, axis=-1, keepdims=True)
    mean = s * inv_d                                    # divide by true D
    var = jnp.maximum(ss * inv_d - mean * mean, 0.0)    # biased variance (torch LN)
    inv = jax.lax.rsqrt(var + LN_EPS)
    xn = (x - mean) * inv * gamma_ref[...] + beta_ref[...]   # padded lanes -> 0

    w = wt_ref[...]                                     # (Dp, Cp), bf16 (or f32)
    y = jnp.dot(xn.astype(w.dtype), w, preferred_element_type=jnp.float32)
    y = y + bias_ref[...]                               # (1, Cp), f32
    o_ref[...] = y.astype(o_ref.dtype)


# ---------------------------------------------------------------------------
# One-time parameter prep (do at setup, NOT per forward call)
# ---------------------------------------------------------------------------
def prepare_params(gamma, beta, weight, bias, *, mxu_dtype=jnp.bfloat16):
    """Pad dim / num_classes to lane-dense multiples of 128 and pre-transpose the
    weight to (D_pad, C_pad) in the MXU operand dtype."""
    C, D = weight.shape
    Dp = _round_up(D, 128)
    Cp = _round_up(C, 128)
    wt = jnp.pad(weight.T, ((0, Dp - D), (0, Cp - C))).astype(mxu_dtype)   # (Dp, Cp)
    gamma2 = jnp.pad(gamma, (0, Dp - D)).reshape(1, Dp).astype(jnp.float32)
    beta2 = jnp.pad(beta, (0, Dp - D)).reshape(1, Dp).astype(jnp.float32)
    bias2 = jnp.pad(bias, (0, Cp - C)).reshape(1, Cp).astype(jnp.float32)
    return dict(wt=wt, gamma=gamma2, beta=beta2, bias=bias2, D=D, C=C, Dp=Dp, Cp=Cp)


# ---------------------------------------------------------------------------
# Hardware-aware sizing
# ---------------------------------------------------------------------------
def _tpu_vmem_and_align():
    """Returns (usable VMEM budget in bytes, preferred batch-row alignment)."""
    cap = None
    try:
        info = pltpu.get_tpu_info()
        cap = getattr(info, "vmem_capacity_bytes", None) or getattr(
            info, "vmem_size_bytes", None)
    except Exception:
        cap = None
    if not cap or cap <= 0:
        cap = 64 * 1024 * 1024          # conservative: v7x per-TensorCore VMEM
    budget = int(cap * 0.70)            # headroom for Mosaic internal scratch/spills

    kind = ""
    try:
        kind = jax.devices()[0].device_kind.lower()
    except Exception:
        pass
    # v6e / v7x MXU is 2x256^2 (256-row M); earlier generations are 128-wide.
    row_align = 256 if ("v6" in kind or "v7" in kind) else 128
    return budget, row_align


def _choose_tb(B, Dp, Cp, x_bytes, out_bytes, mxu_bytes, vmem_budget, row_align):
    """Pick the batch tile TB and estimate the kernel's VMEM occupancy."""
    # Single-buffered resident operands: weight^T + gamma + beta + bias.
    resident = Dp * Cp * mxu_bytes + (2 * Dp + Cp) * 4
    # Per batch-row VMEM: double-buffered x/out tiles + in-kernel temporaries
    # (x as f32, xn f32, xn cast to MXU dtype, y f32 before the output cast).
    per_row = (2 * (x_bytes * Dp + out_bytes * Cp)
               + (8 + mxu_bytes) * Dp + 4 * Cp)

    if B < 8:
        # Tiny batch: single block equal to the full batch extent.
        return B, resident + B * per_row

    avail = max(vmem_budget - resident, 1 << 20)
    tb = avail // per_row
    if tb >= row_align:
        tb = min(2048, (tb // row_align) * row_align)   # fill the MXU M dimension
    else:
        tb = max(8, (tb // 8) * 8)
    tb = min(tb, (B // 8) * 8)           # never exceed the batch extent
    if B >= 2 * row_align:               # keep >=2 grid steps -> v7x megacore split
        tb = min(tb, _round_up(_cdiv(B, 2), row_align))
    tb = max(tb, 8)
    return tb, resident + tb * per_row


# ---------------------------------------------------------------------------
# Wrapper
# ---------------------------------------------------------------------------
def classify(x, params):
    """x: (..., D) -> (..., C) using padded/transposed params from prepare_params."""
    D, C, Dp, Cp = params["D"], params["C"], params["Dp"], params["Cp"]
    assert x.shape[-1] == D
    lead = x.shape[:-1]
    x2 = x.reshape(-1, D)
    B = x2.shape[0]

    # Only materialize a padded copy of x when the feature axis is not already
    # lane-dense.  The batch axis is never padded: the ragged last tile is handled
    # by Pallas (OOB rows are don't-care on read, dropped on writeback).
    if Dp != D:
        x2 = jnp.pad(x2, ((0, 0), (0, Dp - D)))

    x_bytes = jnp.dtype(x2.dtype).itemsize
    out_bytes = x_bytes
    mxu_bytes = jnp.dtype(params["wt"].dtype).itemsize

    vmem_budget, row_align = _tpu_vmem_and_align()
    TB, occupancy = _choose_tb(B, Dp, Cp, x_bytes, out_bytes, mxu_bytes,
                               vmem_budget, row_align)
    grid = (_cdiv(B, TB),)

    # Scoped-VMEM limit: tight around actual occupancy (plus headroom), so it is
    # above the v5e 16-MiB default yet never asks for more than physically exists.
    vmem_limit = int(max(32 << 20, min(vmem_budget, occupancy + (4 << 20))))

    cost = pl.CostEstimate(
        flops=2 * B * Dp * Cp + 6 * B * Dp,
        transcendentals=B,
        bytes_accessed=(B * Dp * x_bytes + Dp * Cp * mxu_bytes
                        + B * Cp * out_bytes + (2 * Dp + Cp) * 4),
    )

    def _resident_spec(shape):
        # Constant-index operands: single VMEM buffer (no pointless double-buffer).
        idx = lambda i: (0,) * len(shape)
        try:
            return pl.BlockSpec(shape, idx, pipeline_mode=pl.Buffered(1))
        except (TypeError, AttributeError):   # older jax without pipeline_mode
            return pl.BlockSpec(shape, idx)

    out = pl.pallas_call(
        functools.partial(classify_kernel, inv_d=1.0 / D),
        out_shape=jax.ShapeDtypeStruct((B, Cp), x.dtype),
        grid_spec=pltpu.PrefetchScalarGridSpec(
            num_scalar_prefetch=0,
            grid=grid,
            in_specs=[
                pl.BlockSpec((TB, Dp), lambda i: (i, 0)),   # x tile, pipelined over B
                _resident_spec((1, Dp)),                    # gamma, VMEM resident
                _resident_spec((1, Dp)),                    # beta
                _resident_spec((Dp, Cp)),                   # weight^T
                _resident_spec((1, Cp)),                    # bias
            ],
            out_specs=pl.BlockSpec((TB, Cp), lambda i: (i, 0)),
        ),
        compiler_params=pltpu.CompilerParams(
            dimension_semantics=("parallel",),              # megacore on v7x
            vmem_limit_bytes=vmem_limit),
        cost_estimate=cost,
    )(x2, params["gamma"], params["beta"], params["wt"], params["bias"])

    if Cp != C:
        out = out[:, :C]
    return out.reshape(lead + (C,))


# ---------------------------------------------------------------------------
# Pure-JAX reference
# ---------------------------------------------------------------------------
def reference(x, gamma, beta, weight, bias):
    xf = x.astype(jnp.float32)
    mean = jnp.mean(xf, axis=-1, keepdims=True)
    var = jnp.mean((xf - mean) ** 2, axis=-1, keepdims=True)
    xn = (xf - mean) / jnp.sqrt(var + LN_EPS) * gamma + beta
    return xn @ weight.T.astype(jnp.float32) + bias


if __name__ == "__main__":
    key = jax.random.PRNGKey(0)
    B, D, C = 8, 32, 16          # batch of token vectors, dim=32, num_classes=16

    k_x, k_w, k_b = jax.random.split(key, 3)
    x = jax.random.normal(k_x, (B, D), dtype=jnp.float32)

    # Deterministic parameter init (PyTorch-like defaults):
    gamma = jnp.ones((D,), dtype=jnp.float32)       # LayerNorm weight
    beta = jnp.zeros((D,), dtype=jnp.float32)       # LayerNorm bias
    bound = 1.0 / (D ** 0.5)
    weight = jax.random.uniform(k_w, (C, D), minval=-bound, maxval=bound,
                                dtype=jnp.float32)  # Linear weight (C, D)
    bias = jax.random.uniform(k_b, (C,), minval=-bound, maxval=bound,
                              dtype=jnp.float32)    # Linear bias (C,)

    # --- full-f32 operand path: tight numerical check -----------------------
    params_f32 = prepare_params(gamma, beta, weight, bias, mxu_dtype=jnp.float32)
    out_f32 = jax.block_until_ready(classify(x, params_f32))
    ref = reference(x, gamma, beta, weight, bias)
    assert out_f32.shape == (B, C)
    assert jnp.allclose(out_f32, ref, atol=1e-4, rtol=1e-4)

    # --- bf16 activations + bf16 MXU operands (default fast path) -----------
    params_bf16 = prepare_params(gamma, beta, weight, bias, mxu_dtype=jnp.bfloat16)
    x_bf16 = x.astype(jnp.bfloat16)
    out_bf16 = jax.block_until_ready(classify(x_bf16, params_bf16))
    ref_bf16 = reference(x_bf16, gamma, beta, weight, bias)
    assert out_bf16.shape == (B, C)
    assert jnp.allclose(out_bf16.astype(jnp.float32), ref_bf16, atol=5e-2, rtol=5e-2)

    # --- leading dims + ragged last batch tile (no wrapper-side batch pad) --
    x3 = jax.random.normal(jax.random.PRNGKey(1), (2, 5, D), dtype=jnp.float32)
    out3 = jax.block_until_ready(classify(x3, params_f32))
    ref3 = reference(x3, gamma, beta, weight, bias)
    assert out3.shape == (2, 5, C)
    assert jnp.allclose(out3, ref3, atol=1e-4, rtol=1e-4)

    print("KERNEL_OK")
</pallas_src>

<mosaic_0001>
module attributes {stable_mosaic.version = 11 : i64} {
  func.func @classify_kernel(%arg0: i32, %arg1: memref<8x128xf32, #tpu.memory_space<vmem>>, %arg2: memref<1x128xf32, #tpu.memory_space<vmem>>, %arg3: memref<1x128xf32, #tpu.memory_space<vmem>>, %arg4: memref<128x128xf32, #tpu.memory_space<vmem>>, %arg5: memref<1x128xf32, #tpu.memory_space<vmem>>, %arg6: memref<8x128xf32, #tpu.memory_space<vmem>>) attributes {dimension_semantics = [#tpu.dimension_semantics<parallel>], iteration_bounds = array<i64: 1>, scalar_prefetch = 0 : i64, scratch_operands = 0 : i64, tpu.core_type = #tpu.core_type<tc>, window_params = [{transform_indices = @transform_0, window_bounds = array<i64: 8, 128>}, {pipeline_mode = #tpu.pipeline_mode<synchronous>, transform_indices = @transform_1, window_bounds = array<i64: 1, 128>}, {pipeline_mode = #tpu.pipeline_mode<synchronous>, transform_indices = @transform_2, window_bounds = array<i64: 1, 128>}, {pipeline_mode = #tpu.pipeline_mode<synchronous>, transform_indices = @transform_3, window_bounds = array<i64: 128, 128>}, {pipeline_mode = #tpu.pipeline_mode<synchronous>, transform_indices = @transform_4, window_bounds = array<i64: 1, 128>}, {transform_indices = @transform_5, window_bounds = array<i64: 8, 128>}]} {
    %c0 = arith.constant 0 : index
    %c0_0 = arith.constant 0 : index
    %0 = vector.load %arg1[%c0, %c0_0] : memref<8x128xf32, #tpu.memory_space<vmem>>, vector<8x128xf32>
    %cst = arith.constant dense<0.000000e+00> : vector<8xf32>
    %1 = vector.multi_reduction <add>, %0, %cst [1] : vector<8x128xf32> to vector<8xf32>
    %2 = vector.shape_cast %1 : vector<8xf32> to vector<8x1xf32>
    %3 = arith.mulf %0, %0 : vector<8x128xf32>
    %cst_1 = arith.constant dense<0.000000e+00> : vector<8xf32>
    %4 = vector.multi_reduction <add>, %3, %cst_1 [1] : vector<8x128xf32> to vector<8xf32>
    %5 = vector.shape_cast %4 : vector<8xf32> to vector<8x1xf32>
    %cst_2 = arith.constant 3.125000e-02 : f32
    %6 = vector.broadcast %cst_2 : f32 to vector<8x1xf32>
    %7 = arith.mulf %2, %6 : vector<8x1xf32>
    %cst_3 = arith.constant 3.125000e-02 : f32
    %8 = vector.broadcast %cst_3 : f32 to vector<8x1xf32>
    %9 = arith.mulf %5, %8 : vector<8x1xf32>
    %10 = arith.mulf %7, %7 : vector<8x1xf32>
    %11 = arith.subf %9, %10 : vector<8x1xf32>
    %cst_4 = arith.constant 0.000000e+00 : f32
    %12 = vector.broadcast %cst_4 : f32 to vector<8x1xf32>
    %13 = arith.maximumf %11, %12 : vector<8x1xf32>
    %cst_5 = arith.constant 9.99999974E-6 : f32
    %14 = vector.broadcast %cst_5 : f32 to vector<8x1xf32>
    %15 = arith.addf %13, %14 : vector<8x1xf32>
    %16 = math.rsqrt %15 : vector<8x1xf32>
    %17 = vector.broadcast %7 : vector<8x1xf32> to vector<8x128xf32>
    %18 = arith.subf %0, %17 : vector<8x128xf32>
    %19 = vector.broadcast %16 : vector<8x1xf32> to vector<8x128xf32>
    %20 = arith.mulf %18, %19 : vector<8x128xf32>
    %c0_6 = arith.constant 0 : index
    %c0_7 = arith.constant 0 : index
    %21 = vector.load %arg2[%c0_6, %c0_7] : memref<1x128xf32, #tpu.memory_space<vmem>>, vector<1x128xf32>
    %22 = vector.broadcast %21 : vector<1x128xf32> to vector<8x128xf32>
    %23 = arith.mulf %20, %22 : vector<8x128xf32>
    %c0_8 = arith.constant 0 : index
    %c0_9 = arith.constant 0 : index
    %24 = vector.load %arg3[%c0_8, %c0_9] : memref<1x128xf32, #tpu.memory_space<vmem>>, vector<1x128xf32>
    %25 = vector.broadcast %24 : vector<1x128xf32> to vector<8x128xf32>
    %26 = arith.addf %23, %25 : vector<8x128xf32>
    %c0_10 = arith.constant 0 : index
    %c0_11 = arith.constant 0 : index
    %27 = vector.load %arg4[%c0_10, %c0_11] : memref<128x128xf32, #tpu.memory_space<vmem>>, vector<128x128xf32>
    %cst_12 = arith.constant dense<0.000000e+00> : vector<8x128xf32>
    %28 = tpu.matmul %26, %27, %cst_12 {dimension_numbers = #tpu.dot_dimension_numbers<[1], [0], [0], [1], [0, 0, 1, 1], [], []>} : vector<8x128xf32>, vector<128x128xf32>, vector<8x128xf32> -> vector<8x128xf32>
    %c0_13 = arith.constant 0 : index
    %c0_14 = arith.constant 0 : index
    %29 = vector.load %arg5[%c0_13, %c0_14] : memref<1x128xf32, #tpu.memory_space<vmem>>, vector<1x128xf32>
    %30 = vector.broadcast %29 : vector<1x128xf32> to vector<8x128xf32>
    %31 = arith.addf %28, %30 : vector<8x128xf32>
    %c0_15 = arith.constant 0 : index
    %c0_16 = arith.constant 0 : index
    %32 = vector.load %arg6[%c0_15, %c0_16] : memref<8x128xf32, #tpu.memory_space<vmem>>, vector<8x128xf32>
    tpu.vector_store %arg6[%c0_15, %c0_16], %31 {strides = array<i32>} : memref<8x128xf32, #tpu.memory_space<vmem>>, vector<8x128xf32>,
    return
  }
  func.func @transform_0(%arg0: i32) -> (i32, i32) {
    %c0_i32 = arith.constant 0 : i32
    %c0_i32_0 = arith.constant 0 : i32
    return %arg0, %c0_i32 : i32, i32
  }
  func.func @transform_1(%arg0: i32) -> (i32, i32) {
    %c0_i32 = arith.constant 0 : i32
    %c0_i32_0 = arith.constant 0 : i32
    %c0_i32_1 = arith.constant 0 : i32
    return %c0_i32, %c0_i32_0 : i32, i32
  }
  func.func @transform_2(%arg0: i32) -> (i32, i32) {
    %c0_i32 = arith.constant 0 : i32
    %c0_i32_0 = arith.constant 0 : i32
    %c0_i32_1 = arith.constant 0 : i32
    return %c0_i32, %c0_i32_0 : i32, i32
  }
  func.func @transform_3(%arg0: i32) -> (i32, i32) {
    %c0_i32 = arith.constant 0 : i32
    %c0_i32_0 = arith.constant 0 : i32
    %c0_i32_1 = arith.constant 0 : i32
    return %c0_i32, %c0_i32_0 : i32, i32
  }
  func.func @transform_4(%arg0: i32) -> (i32, i32) {
    %c0_i32 = arith.constant 0 : i32
    %c0_i32_0 = arith.constant 0 : i32
    %c0_i32_1 = arith.constant 0 : i32
    return %c0_i32, %c0_i32_0 : i32, i32
  }
  func.func @transform_5(%arg0: i32) -> (i32, i32) {
    %c0_i32 = arith.constant 0 : i32
    %c0_i32_0 = arith.constant 0 : i32
    return %arg0, %c0_i32 : i32, i32
  }
}

</mosaic_0001>

<llo_original>
// kernel: tpu_custom_call.1
$region0: #{tpu_custom_call.1}
  #allocation0 [shape = 'u32[]', space=smem, size = 0x4, offset = 0x4, fixed_abs, tag = 'smem constant byte address 0x4 - core index']
  #allocation1 [shape = 'u32[144,128]{1,0:T(1,128)}', space=vmem, size = 0x12000, scoped, tag = 'internal scratch']
  %s0 = inlined_call_operand.hbm [shape: f32[8,128], index: 0, kind: input, shape index: {}]
  %s1 = inlined_call_operand.vmem [shape: f32[1,128], index: 1, kind: input, shape index: {}]
  %s2 = inlined_call_operand.vmem [shape: f32[1,128], index: 2, kind: input, shape index: {}]
  %s3 = inlined_call_operand.hbm [shape: f32[128,128], index: 3, kind: input, shape index: {}]
  %s4 = inlined_call_operand.vmem [shape: f32[1,128], index: 4, kind: input, shape index: {}]
  %s5 = inlined_call_operand.hbm [shape: f32[8,128], index: 5, kind: output, shape index: {}]
  %s6 = sld [smem:[#allocation0]]
  $region38: #{tpu_custom_call.1} parent=0
    _
  %s8 = ssub.s32 1, %s6
  %s9 = scalar_select 0, %s8, %s6
  $region1: #{tpu_custom_call.1} parent=0
    #allocation2 [shape = 'u8[4096]{0}', space=vmem, size = 0x1000, scoped, tag = 'input window, operand 0, single buffered']
    #allocation3 [shape = 's32[1]{0}', space=sflag, size = 0x4, scoped, tag = 'scoped memory for tpu_custom_call.1']
    #allocation4 [shape = 's32[1]{0}', space=sflag, size = 0x4, scoped, tag = 'scoped memory for tpu_custom_call.1']
    #allocation5 [shape = 'u8[65536]{0}', space=vmem, size = 0x10000, scoped, tag = 'input window, operand 3, single buffered']
    #allocation6 [shape = 's32[1]{0}', space=sflag, size = 0x4, scoped, tag = 'scoped memory for tpu_custom_call.1']
    #allocation7 [shape = 'u8[4096]{0}', space=vmem, size = 0x1000, scoped, tag = 'output window, operand 0, single buffered']
    %10 = vsyncpa [#allocation3], 0
    %11 = vsyncpa [#allocation6], 0
    %12 = vsyncpa [#allocation4], 0
    // Predicated region
    $region2: #{tpu_custom_call.1} parent=1 // pred_check
      _
    $region3: #{tpu_custom_call.1} parent=1 // pred_check_branch
      %14 = sbr.rel (0) target = $region5
    $region4: #{tpu_custom_call.1} parent=1 // pred_region
      %s16 = ssub.s32 128, 128
      %17 = vsyncadd [#allocation3], %s16
      %s19 = sshll.u32 [#allocation2], 4
      %s20 = int_to_ptr.vmem [resolvable:$true] %s19
      %22 = dma.hbm_to_vmem [thread:$0]  %s0, 128, %s20, [#allocation3]
    $region5: #{tpu_custom_call.1} parent=1 // pred_fallthru
      _
    // Predicated region
    $region6: #{tpu_custom_call.1} parent=1 // pred_check
      _
    $region7: #{tpu_custom_call.1} parent=1 // pred_check_branch
      %24 = sbr.rel (0) target = $region9
    $region8: #{tpu_custom_call.1} parent=1 // pred_region
      _
    $region9: #{tpu_custom_call.1} parent=1 // pred_fallthru
      _
    // Predicated region
    $region10: #{tpu_custom_call.1} parent=1 // pred_check
      _
    $region11: #{tpu_custom_call.1} parent=1 // pred_check_branch
      %26 = sbr.rel (0) target = $region13
    $region12: #{tpu_custom_call.1} parent=1 // pred_region
      _
    $region13: #{tpu_custom_call.1} parent=1 // pred_fallthru
      _
    // Predicated region
    $region14: #{tpu_custom_call.1} parent=1 // pred_check
      _
    $region15: #{tpu_custom_call.1} parent=1 // pred_check_branch
      %28 = sbr.rel (0) target = $region17
    $region16: #{tpu_custom_call.1} parent=1 // pred_region
      %s30 = ssub.s32 2048, 2048
      %31 = vsyncadd [#allocation6], %s30
      %s32 = sshll.u32 [#allocation5], 4
      %s33 = int_to_ptr.vmem [resolvable:$true] %s32
      %38 = dma.hbm_to_vmem [thread:$0]  %s3, 2048, %s33, [#allocation6], 128, 128, 8
    $region17: #{tpu_custom_call.1} parent=1 // pred_fallthru
      _
    // Predicated region
    $region18: #{tpu_custom_call.1} parent=1 // pred_check
      _
    $region19: #{tpu_custom_call.1} parent=1 // pred_check_branch
      %40 = sbr.rel (0) target = $region21
    $region20: #{tpu_custom_call.1} parent=1 // pred_region
      _
    $region21: #{tpu_custom_call.1} parent=1 // pred_fallthru
      _
    // Predicated region
    $region22: #{tpu_custom_call.1} parent=1 // pred_check
      _
    $region23: #{tpu_custom_call.1} parent=1 // pred_check_branch
      %42 = sbr.rel (0) target = $region25
    $region24: #{tpu_custom_call.1} parent=1 // pred_region
      %43 = dma.done [#allocation3], 128
    $region25: #{tpu_custom_call.1} parent=1 // pred_fallthru
      _
    // Predicated region
    $region26: #{tpu_custom_call.1} parent=1 // pred_check
      _
    $region27: #{tpu_custom_call.1} parent=1 // pred_check_branch
      %45 = sbr.rel (0) target = $region29
    $region28: #{tpu_custom_call.1} parent=1 // pred_region
      %46 = dma.done [#allocation6], 2048
    $region29: #{tpu_custom_call.1} parent=1 // pred_fallthru
      _
    %v47 = vld [vmem:[#allocation2] sm:$0xff]
    %48 = vadd.xlane.f32.xlu0 %v47
    %v49 = vpop.xlane.xlu0 %48
    %v50 = vmul.f32 %v47, %v47
    %51 = vadd.xlane.f32.xlu0 %v50
    %v52 = vpop.xlane.xlu0 %51
    %v53 = vmul.f32 %v49, 0.03125
    %v54 = vmul.f32 %v52, 0.03125
    %v55 = vmul.f32 %v53, %v53
    %v56 = vsub.f32 %v54, %v55
    %v57 = vmax.f32 %v56, 0.0
    %v58 = vadd.f32 %v57, 1e-05
    %v59 = vrsqrt.pop %v58
    %v60 = vsub.f32 %v47, %v53
    %v61 = vmul.f32 %v60, %v59
    %v62 = vld [vmem:[%s1] sm:$0x1]
    %v64 = vlaneseq
    %v65 = vshrl.u32 %v64, 7
    %v66 = vsub.s32 0, %v65
    %v67 = vrot.slane %v62, %v66
    %v69 = vmul.f32 %v61, %v67
    %v70 = vld [vmem:[%s2] sm:$0x1]
    %v72 = vlaneseq
    %v73 = vshrl.u32 %v72, 7
    %v74 = vsub.s32 0, %v73
    %v75 = vrot.slane %v70, %v74
    %v77 = vadd.f32 %v69, %v75
    %v78 = vld [vmem:[#allocation5] sm:$0xff]
    %v79 = vld [vmem:[#allocation5 + $0x8] sm:$0xff]
    %v80 = vld [vmem:[#allocation5 + $0x10] sm:$0xff]
    %v81 = vld [vmem:[#allocation5 + $0x18] sm:$0xff]
    %v82 = vld [vmem:[#allocation5 + $0x20] sm:$0xff]
    %v83 = vld [vmem:[#allocation5 + $0x28] sm:$0xff]
    %v84 = vld [vmem:[#allocation5 + $0x30] sm:$0xff]
    %v85 = vld [vmem:[#allocation5 + $0x38] sm:$0xff]
    %v86 = vld [vmem:[#allocation5 + $0x40] sm:$0xff]
    %v87 = vld [vmem:[#allocation5 + $0x48] sm:$0xff]
    %v88 = vld [vmem:[#allocation5 + $0x50] sm:$0xff]
    %v89 = vld [vmem:[#allocation5 + $0x58] sm:$0xff]
    %v90 = vld [vmem:[#allocation5 + $0x60] sm:$0xff]
    %v91 = vld [vmem:[#allocation5 + $0x68] sm:$0xff]
    %v92 = vld [vmem:[#allocation5 + $0x70] sm:$0xff]
    %v93 = vld [vmem:[#allocation5 + $0x78] sm:$0xff]
    %v94 = vld [vmem:[%s4] sm:$0x1]
    %v96 = vlaneseq
    %v97 = vshrl.u32 %v96, 7
    %v98 = vsub.s32 0, %v97
    %v99 = vrot.slane %v94, %v98
    %101 = vmatprep.subr.mxu0 0.0
    %102 = vmatpush1.msra.mxu0 %v93
    %103 = vmatprep.subr.mxu0 0.0
    %104 = vmatpush1.msra.mxu0 %v92
    %105 = vmatprep.subr.mxu0 0.0
    %106 = vmatpush1.msra.mxu0 %v91
    %107 = vmatprep.subr.mxu0 0.0
    %108 = vmatpush1.msra.mxu0 %v90
    %109 = vmatprep.subr.mxu0 0.0
    %110 = vmatpush1.msra.mxu0 %v89
    %111 = vmatprep.subr.mxu0 0.0
    %112 = vmatpush1.msra.mxu0 %v88
    %113 = vmatprep.subr.mxu0 0.0
    %114 = vmatpush1.msra.mxu0 %v87
    %115 = vmatprep.subr.mxu0 0.0
    %116 = vmatpush1.msra.mxu0 %v86
    %117 = vmatprep.subr.mxu0 0.0
    %118 = vmatpush1.msra.mxu0 %v85
    %119 = vmatprep.subr.mxu0 0.0
    %120 = vmatpush1.msra.mxu0 %v84
    %121 = vmatprep.subr.mxu0 0.0
    %122 = vmatpush1.msra.mxu0 %v83
    %123 = vmatprep.subr.mxu0 0.0
    %124 = vmatpush1.msra.mxu0 %v82
    %125 = vmatprep.subr.mxu0 0.0
    %126 = vmatpush1.msra.mxu0 %v81
    %127 = vmatprep.subr.mxu0 0.0
    %128 = vmatpush1.msra.mxu0 %v80
    %129 = vmatprep.subr.mxu0 0.0
    %130 = vmatpush1.msra.mxu0 %v79
    %131 = vmatprep.subr.mxu0 0.0
    %132 = vmatpush1.msra.mxu0 %v78
    %133 = vmatprep.subr.mxu0 0.0
    %134 = vmatpush2.msra.mxu0 0.0
    %135 = vmatprep.subr.mxu0 0.0
    %136 = vmatpush2.msra.mxu0 0.0
    %137 = vmatprep.subr.mxu0 0.0
    %138 = vmatpush2.msra.mxu0 0.0
    %139 = vmatprep.subr.mxu0 0.0
    %140 = vmatpush2.msra.mxu0 0.0
    %141 = vmatprep.subr.mxu0 0.0
    %142 = vmatpush2.msra.mxu0 0.0
    %143 = vmatprep.subr.mxu0 0.0
    %144 = vmatpush2.msra.mxu0 0.0
    %145 = vmatprep.subr.mxu0 0.0
    %146 = vmatpush2.msra.mxu0 0.0
    %147 = vmatprep.subr.mxu0 0.0
    %148 = vmatpush2.msra.mxu0 0.0
    %149 = vmatprep.subr.mxu0 0.0
    %150 = vmatpush2.msra.mxu0 0.0
    %151 = vmatprep.subr.mxu0 0.0
    %152 = vmatpush2.msra.mxu0 0.0
    %153 = vmatprep.subr.mxu0 0.0
    %154 = vmatpush2.msra.mxu0 0.0
    %155 = vmatprep.subr.mxu0 0.0
    %156 = vmatpush2.msra.mxu0 0.0
    %157 = vmatprep.subr.mxu0 0.0
    %158 = vmatpush2.msra.mxu0 0.0
    %159 = vmatprep.subr.mxu0 0.0
    %160 = vmatpush2.msra.mxu0 0.0
    %161 = vmatprep.subr.mxu0 0.0
    %162 = vmatpush2.msra.mxu0 0.0
    %163 = vmatprep.subr.mxu0 0.0
    %164 = vmatpush2.msra.mxu0 0.0
    %165 = vmatprep.mubr.f32.mxu0 0.0
    %166 = vmatmul.mubr.f32.gmra.mxu0 %v77
    %v167 = vpop.f32.mrf.mxu0
    %v168 = vadd.f32 %v99, %v167
    %v169 = vpop.f32.mrf.mxu0
    %170 = vdwg.mxu0
    %171 = vst [vmem:[#allocation7] sm:$0xff] %v168
    // Predicated region
    $region30: #{tpu_custom_call.1} parent=1 // pred_check
      _
    $region31: #{tpu_custom_call.1} parent=1 // pred_check_branch
      %173 = sbr.rel (0) target = $region33
    $region32: #{tpu_custom_call.1} parent=1 // pred_region
      %s175 = ssub.s32 128, 128
      %176 = vsyncadd [#allocation4], %s175
      %s178 = sshll.u32 [#allocation7], 4
      %s179 = int_to_ptr.vmem [resolvable:$true] %s178
      %181 = dma.vmem_to_hbm [thread:$0]  %s179, 128, %s5, [#allocation4]
    $region33: #{tpu_custom_call.1} parent=1 // pred_fallthru
      _
    // Predicated region
    $region34: #{tpu_custom_call.1} parent=1 // pred_check
      _
    $region35: #{tpu_custom_call.1} parent=1 // pred_check_branch
      %183 = sbr.rel (0) target = $region37
    $region36: #{tpu_custom_call.1} parent=1 // pred_region
      %184 = dma.done [#allocation4], 128
    $region37: #{tpu_custom_call.1} parent=1 // pred_fallthru
      _
    %185 = vsyncpa [#allocation3], 1
    %186 = vsyncpa [#allocation6], 1
    %187 = vsyncpa [#allocation4], 1

</llo_original>
